<compile_context>
chip_gen: v6e
topology: v6e:2x2x1
jax: 0.10.0
libtpu: 0.0.40
codegen_flags: <defaults>
</compile_context>

<pallas_src>
import numpy as np
import jax
import jax.numpy as jnp
from jax.experimental import pallas as pl
from jax.experimental.pallas import tpu as pltpu

LEAK = 0.01   # F.leaky_relu default negative_slope
KW = 3        # Conv1d kernel size
WIN = 6       # temporal window used by ModelQ: steps t-3 .. t+2
PW = 128      # padded lane width for all weights / intermediates (lane-dense)
HALF = 64     # sigma head starts at this output column


def _leaky(x):
    return jnp.where(x > 0, x, LEAK * x)


def _align8(n):
    return (n + 7) // 8 * 8


# --------------------------------------------------------------------------- #
# Kernel
# --------------------------------------------------------------------------- #
def _make_kernel(lay):
    """lay: dict name -> (row_offset, n_rows) inside the packed parameter buffer."""
    C1 = lay["w2t"][1]     # WIN * 8 = 48 : real width of the conv activations
    h0 = lay["wl2"][1]     # hidden dim of linear1
    h1 = lay["whead"][1]   # hidden dim of linear2

    def kernel(xw_ref, st_ref, p_ref, out_ref):
        def w(name):
            off, n = lay[name]
            return p_ref[off:off + n, :]            # static (free) ref slice

        b_off, _ = lay["bias"]
        biases = p_ref[b_off:b_off + 8, :]          # rows: b1t, b2t, bl1, bl2, bhead

        xw = xw_ref[...]                            # [Bp, WIN*cin]  time window
        st = st_ref[...]                            # [Bp, state_dim]

        # conv1 (k=3, 'same') as ONE block-Toeplitz matmul -> [Bp, 128]
        y = _leaky(jnp.dot(xw, w("w1t"), preferred_element_type=jnp.float32)
                   + biases[0:1, :])
        # conv2 as ONE banded matmul (trimmed K = C1)
        y = _leaky(jnp.dot(y[:, :C1], w("w2t"), preferred_element_type=jnp.float32)
                   + biases[1:2, :])
        # sum-over-time fused into linear1 (wl1f tiled across the 6 time blocks)
        h = _leaky(jnp.dot(y[:, :C1], w("wl1f"), preferred_element_type=jnp.float32)
                   + jnp.dot(st, w("wl1s"), preferred_element_type=jnp.float32)
                   + biases[2:3, :])
        h = _leaky(jnp.dot(h[:, :h0], w("wl2"), preferred_element_type=jnp.float32)
                   + biases[3:4, :])
        # fused mu/sigma head: mu in cols [0, 64), sigma in cols [64, 128)
        out = (jnp.dot(h[:, :h1], w("whead"), preferred_element_type=jnp.float32)
               + biases[4:5, :])

        col = jax.lax.broadcasted_iota(jnp.int32, out.shape, 1)
        mu = jnp.clip(out, -2.0, 2.0)
        sp = jnp.maximum(out, 0.0) + jnp.log1p(jnp.exp(-jnp.abs(out)))   # stable softplus
        sg = jnp.clip(sp, 1e-10, 1.0)
        out_ref[...] = jnp.where(col < HALF, mu, sg)

    return kernel


# --------------------------------------------------------------------------- #
# Host-side parameter packing (block-Toeplitz construction, single VMEM buffer,
# structurally-zero rows trimmed)
# --------------------------------------------------------------------------- #
def pack_params(params):
    """Pack the 13 natural parameters into one [R, 128] f32 buffer + row layout.

    Conv weights arrive tap-major: w[k*cin + c, o] == W_torch[o, c, k].
    """
    (w1, b1, w2, b2, wl1f, wl1s, bl1, wl2, bl2, wmu, bmu, wsg, bsg) = [
        np.asarray(p, np.float32) for p in params]
    cin = w1.shape[0] // KW
    h0 = wl1f.shape[1]
    h1 = wl2.shape[1]
    sd = wmu.shape[1]
    C1 = WIN * 8                                    # real width of conv Toeplitz cols
    assert C1 <= PW and h0 <= PW and h1 <= PW and sd <= HALF

    w1t = np.zeros((WIN * cin, PW), np.float32)     # conv1 block-Toeplitz
    w2t = np.zeros((C1, PW), np.float32)            # conv2 banded matrix (trimmed rows)
    for l in range(WIN):
        for p in range(WIN):
            k = p - l + 1                           # 'same': out[l] uses in[l + k - 1]
            if 0 <= k < KW:
                w1t[p * cin:(p + 1) * cin, l * 8:(l + 1) * 8] = w1[k * cin:(k + 1) * cin, :]
                w2t[p * 8:(p + 1) * 8, l * 8:(l + 1) * 8] = w2[k * 8:(k + 1) * 8, :]

    wl1f_t = np.zeros((C1, PW), np.float32)
    wl1f_t[:, :h0] = np.tile(wl1f, (WIN, 1))        # fuses the sum over 6 time blocks
    wl1s_t = np.zeros((sd, PW), np.float32)
    wl1s_t[:, :h0] = wl1s
    wl2_t = np.zeros((h0, PW), np.float32)
    wl2_t[:, :h1] = wl2
    whead = np.zeros((h1, PW), np.float32)          # fused mu | sigma head
    whead[:, :sd] = wmu
    whead[:, HALF:HALF + sd] = wsg

    biases = np.zeros((8, PW), np.float32)
    biases[0, :C1] = np.tile(b1[0], WIN)
    biases[1, :C1] = np.tile(b2[0], WIN)
    biases[2, :h0] = bl1[0]
    biases[3, :h1] = bl2[0]
    biases[4, :sd] = bmu[0]
    biases[4, HALF:HALF + sd] = bsg[0]

    blocks = [("w1t", w1t), ("w2t", w2t), ("wl1f", wl1f_t), ("wl1s", wl1s_t),
              ("wl2", wl2_t), ("whead", whead), ("bias", biases)]
    layout, rows, off = {}, [], 0
    for name, blk in blocks:
        layout[name] = (off, blk.shape[0])
        padded = _align8(blk.shape[0])
        if padded != blk.shape[0]:
            blk = np.concatenate(
                [blk, np.zeros((padded - blk.shape[0], PW), np.float32)], axis=0)
        rows.append(blk)
        off += padded
    packed = jnp.asarray(np.concatenate(rows, axis=0))   # keep f32 (see header note)
    return packed, layout


# --------------------------------------------------------------------------- #
# Wrapper factory: one jitted, grid-amortized forward over S independent steps
# --------------------------------------------------------------------------- #
def make_modelq_forward(layout):
    kernel = _make_kernel(layout)

    @jax.jit
    def forward_steps(packed, obs, states, input_, obs_mask, ts):
        """Evaluate ModelQ's forward for S independent (t, state) pairs.

        obs:    [B, T, obs_dim]        input_: [B, T, input_dim]
        states: [S, B, state_dim]      ts:     [S] int32 timesteps
        Returns (mu, sigma), each [S, B, state_dim].
        """
        del obs_mask  # obs_mask_enabled=False in this configuration
        if input_.shape[-1] > 0:
            x1 = jnp.concatenate([obs, input_], axis=-1)
        else:
            x1 = obs
        B, T, cin = x1.shape
        S = ts.shape[0]
        sd = states.shape[-1]
        F = WIN * cin

        # ConstantPad1d(3, 0) on time; gather all S six-step windows t-3..t+2,
        # flatten position-major.  (Conv 'same' zero padding is baked into the
        # Toeplitz weights, so no extra zero steps are appended.)
        x1p = jnp.pad(x1, ((0, 0), (3, 3), (0, 0)))
        idx = ts[:, None] + jnp.arange(WIN)[None, :]          # [S, WIN]
        xw = jnp.transpose(x1p[:, idx, :], (1, 0, 2, 3))      # [S, B, WIN, cin]
        xw = xw.reshape(S, B, F).astype(jnp.float32)
        st = states.astype(jnp.float32)

        # Pad the batch to the 8-row sublane height -> unmasked stores, full MXU rows.
        Bp = _align8(B)
        if Bp != B:
            xw = jnp.pad(xw, ((0, 0), (0, Bp - B), (0, 0)))
            st = jnp.pad(st, ((0, 0), (0, Bp - B), (0, 0)))

        R = packed.shape[0]
        out = pl.pallas_call(
            kernel,
            grid=(S,),
            out_shape=jax.ShapeDtypeStruct((S, Bp, PW), jnp.float32),
            in_specs=[
                pl.BlockSpec((None, Bp, F), lambda s: (s, 0, 0)),   # per-step window
                pl.BlockSpec((None, Bp, sd), lambda s: (s, 0, 0)),  # per-step state
                pl.BlockSpec((R, PW), lambda s: (0, 0)),            # params: VMEM-resident
            ],
            out_specs=pl.BlockSpec((None, Bp, PW), lambda s: (s, 0, 0)),
            compiler_params=pltpu.CompilerParams(
                dimension_semantics=("parallel",)),                 # 2 TCs on v7x
        )(xw, st, packed)

        mu = out[:, :B, :sd]
        sigma = out[:, :B, HALF:HALF + sd]
        return mu, sigma

    return forward_steps


# --------------------------------------------------------------------------- #
# Synthetic parameters + pure-JAX reference (torch semantics, NCW convs)
# --------------------------------------------------------------------------- #
def init_params(key, obs_dim, input_dim, state_dim, h_dim=(16, 16)):
    """Deterministic synthetic parameters in natural (tap-major / [in,out]) layouts."""
    cin = obs_dim + input_dim
    ks = jax.random.split(key, 13)
    n = lambda k, shape, s=0.1: (s * jax.random.normal(k, shape)).astype(jnp.float32)
    h0, h1 = h_dim
    w1 = n(ks[0], (KW * cin, 8))          # conv1 weight, w1[k*cin+c, o] == W[o, c, k]
    b1 = n(ks[1], (1, 8))
    w2 = n(ks[2], (KW * 8, 8))            # conv2 weight
    b2 = n(ks[3], (1, 8))
    wl1f = n(ks[4], (8, h0))              # linear1, feature part of the cat input
    wl1s = n(ks[5], (state_dim, h0))      # linear1, state part
    bl1 = n(ks[6], (1, h0))
    wl2 = n(ks[7], (h0, h1))
    bl2 = n(ks[8], (1, h1))
    wmu = n(ks[9], (h1, state_dim), 0.01)
    bmu = n(ks[10], (1, state_dim))
    wsg = n(ks[11], (h1, state_dim), 0.01)
    bsg = n(ks[12], (1, state_dim))
    return (w1, b1, w2, b2, wl1f, wl1s, bl1, wl2, bl2, wmu, bmu, wsg, bsg)


def reference_forward(params, obs, current_state, input_, t):
    """Pure-JAX reference reproducing the torch forward (NCW convs)."""
    (w1, b1, w2, b2, wl1f, wl1s, bl1, wl2, bl2, wmu, bmu, wsg, bsg) = params
    cin = obs.shape[-1] + input_.shape[-1]
    x1 = jnp.concatenate([obs, input_], axis=-1)
    x1 = jnp.transpose(x1, (0, 2, 1))                           # [B, Cin, T]
    x1 = jnp.pad(x1, ((0, 0), (0, 0), (3, 3)))
    x1 = jax.lax.dynamic_slice(x1, (0, 0, t), (x1.shape[0], cin, WIN))

    W1 = jnp.transpose(w1.reshape(KW, cin, 8), (2, 1, 0))       # [O, I, K]
    y = jax.lax.conv_general_dilated(x1, W1, (1,), 'SAME',
                                     dimension_numbers=('NCH', 'OIH', 'NCH'))
    y = _leaky(y + b1.reshape(1, 8, 1))
    W2 = jnp.transpose(w2.reshape(KW, 8, 8), (2, 1, 0))
    y = jax.lax.conv_general_dilated(y, W2, (1,), 'SAME',
                                     dimension_numbers=('NCH', 'OIH', 'NCH'))
    y = _leaky(y + b2.reshape(1, 8, 1))
    feat = jnp.sum(y, axis=2)                                   # [B, 8]

    h = _leaky(feat @ wl1f + current_state @ wl1s + bl1)
    h = _leaky(h @ wl2 + bl2)
    m = jnp.clip(h @ wmu + bmu, -2.0, 2.0)
    s = jnp.clip(jax.nn.softplus(h @ wsg + bsg), 1e-10, 1.0)
    return m, s


if __name__ == "__main__":
    B, T = 2, 16
    obs_dim, input_dim, state_dim = 5, 3, 4

    key = jax.random.PRNGKey(0)
    k1, k2, k3, k4, kp = jax.random.split(key, 5)
    obs = jax.random.normal(k1, (B, T, obs_dim), jnp.float32)
    inp = jax.random.normal(k2, (B, T, input_dim), jnp.float32)
    obs_mask = jnp.ones((B, T, obs_dim), jnp.float32)   # unused (obs_mask_enabled=False)

    params = init_params(kp, obs_dim, input_dim, state_dim)
    packed, layout = pack_params(params)
    forward_steps = make_modelq_forward(layout)

    # ---- multi-step call: S independent (t, state) evaluations, one launch ----
    ts = jnp.asarray([3, 5, 7, 12], jnp.int32)
    S = int(ts.shape[0])
    states = jax.random.normal(k3, (S, B, state_dim), jnp.float32)
    mu, sigma = jax.block_until_ready(
        forward_steps(packed, obs, states, inp, obs_mask, ts))
    assert mu.shape == (S, B, state_dim) and sigma.shape == (S, B, state_dim)
    for s in range(S):
        mu_r, sg_r = reference_forward(params, obs, states[s], inp, int(ts[s]))
        assert jnp.allclose(mu[s], mu_r, atol=1e-5, rtol=1e-4)
        assert jnp.allclose(sigma[s], sg_r, atol=1e-5, rtol=1e-4)

    # ---- single-step call (original ModelQ.forward interface: one t, one state) ----
    t1 = 7
    state1 = jax.random.normal(k4, (B, state_dim), jnp.float32)
    mu1, sg1 = jax.block_until_ready(
        forward_steps(packed, obs, state1[None], inp, obs_mask,
                      jnp.asarray([t1], jnp.int32)))
    mu_r, sg_r = reference_forward(params, obs, state1, inp, t1)
    assert jnp.allclose(mu1[0], mu_r, atol=1e-5, rtol=1e-4)
    assert jnp.allclose(sg1[0], sg_r, atol=1e-5, rtol=1e-4)

    print("KERNEL_OK")
</pallas_src>

<mosaic_0001>
module attributes {stable_mosaic.version = 11 : i64} {
  func.func @kernel(%arg0: i32, %arg1: memref<1x8x48xf32, #tpu.memory_space<vmem>>, %arg2: memref<1x8x4xf32, #tpu.memory_space<vmem>>, %arg3: memref<192x128xf32, #tpu.memory_space<vmem>>, %arg4: memref<1x8x128xf32, #tpu.memory_space<vmem>>) attributes {dimension_semantics = [#tpu.dimension_semantics<parallel>], iteration_bounds = array<i64: 4>, scalar_prefetch = 0 : i64, scratch_operands = 0 : i64, tpu.core_type = #tpu.core_type<tc>, window_params = [{transform_indices = @transform_0, window_bounds = array<i64: 1, 8, 48>}, {transform_indices = @transform_1, window_bounds = array<i64: 1, 8, 4>}, {pipeline_mode = #tpu.pipeline_mode<synchronous>, transform_indices = @transform_2, window_bounds = array<i64: 192, 128>}, {transform_indices = @transform_3, window_bounds = array<i64: 1, 8, 128>}]} {
    %c184 = arith.constant 184 : index
    %c0 = arith.constant 0 : index
    %0 = vector.load %arg3[%c184, %c0] : memref<192x128xf32, #tpu.memory_space<vmem>>, vector<8x128xf32>
    %c0_0 = arith.constant 0 : index
    %c0_1 = arith.constant 0 : index
    %c0_2 = arith.constant 0 : index
    %1 = vector.load %arg1[%c0_0, %c0_1, %c0_2] : memref<1x8x48xf32, #tpu.memory_space<vmem>>, vector<1x8x48xf32>
    %2 = vector.shape_cast %1 : vector<1x8x48xf32> to vector<8x48xf32>
    %c0_3 = arith.constant 0 : index
    %c0_4 = arith.constant 0 : index
    %c0_5 = arith.constant 0 : index
    %3 = vector.load %arg2[%c0_3, %c0_4, %c0_5] : memref<1x8x4xf32, #tpu.memory_space<vmem>>, vector<1x8x4xf32>
    %4 = vector.shape_cast %3 : vector<1x8x4xf32> to vector<8x4xf32>
    %c0_6 = arith.constant 0 : index
    %c0_7 = arith.constant 0 : index
    %5 = vector.load %arg3[%c0_6, %c0_7] : memref<192x128xf32, #tpu.memory_space<vmem>>, vector<48x128xf32>
    %cst = arith.constant dense<0.000000e+00> : vector<8x128xf32>
    %6 = tpu.matmul %2, %5, %cst {dimension_numbers = #tpu.dot_dimension_numbers<[1], [0], [0], [1], [0, 0, 1, 1], [], []>} : vector<8x48xf32>, vector<48x128xf32>, vector<8x128xf32> -> vector<8x128xf32>
    %7 = vector.extract_strided_slice %0 {offsets = [0, 0], sizes = [1, 128], strides = [1, 1]} : vector<8x128xf32> to vector<1x128xf32>
    %8 = vector.broadcast %7 : vector<1x128xf32> to vector<8x128xf32>
    %9 = arith.addf %6, %8 : vector<8x128xf32>
    %cst_8 = arith.constant 0.000000e+00 : f32
    %10 = vector.broadcast %cst_8 : f32 to vector<8x128xf32>
    %11 = arith.cmpf ogt, %9, %10 : vector<8x128xf32>
    %cst_9 = arith.constant 0.00999999977 : f32
    %12 = vector.broadcast %cst_9 : f32 to vector<8x128xf32>
    %13 = arith.mulf %12, %9 : vector<8x128xf32>
    %14 = arith.select %11, %9, %13 : vector<8x128xi1>, vector<8x128xf32>
    %15 = vector.extract_strided_slice %14 {offsets = [0, 0], sizes = [8, 48], strides = [1, 1]} : vector<8x128xf32> to vector<8x48xf32>
    %c48 = arith.constant 48 : index
    %c0_10 = arith.constant 0 : index
    %16 = vector.load %arg3[%c48, %c0_10] : memref<192x128xf32, #tpu.memory_space<vmem>>, vector<48x128xf32>
    %cst_11 = arith.constant dense<0.000000e+00> : vector<8x128xf32>
    %17 = tpu.matmul %15, %16, %cst_11 {dimension_numbers = #tpu.dot_dimension_numbers<[1], [0], [0], [1], [0, 0, 1, 1], [], []>} : vector<8x48xf32>, vector<48x128xf32>, vector<8x128xf32> -> vector<8x128xf32>
    %18 = vector.extract_strided_slice %0 {offsets = [1, 0], sizes = [1, 128], strides = [1, 1]} : vector<8x128xf32> to vector<1x128xf32>
    %19 = vector.broadcast %18 : vector<1x128xf32> to vector<8x128xf32>
    %20 = arith.addf %17, %19 : vector<8x128xf32>
    %cst_12 = arith.constant 0.000000e+00 : f32
    %21 = vector.broadcast %cst_12 : f32 to vector<8x128xf32>
    %22 = arith.cmpf ogt, %20, %21 : vector<8x128xf32>
    %cst_13 = arith.constant 0.00999999977 : f32
    %23 = vector.broadcast %cst_13 : f32 to vector<8x128xf32>
    %24 = arith.mulf %23, %20 : vector<8x128xf32>
    %25 = arith.select %22, %20, %24 : vector<8x128xi1>, vector<8x128xf32>
    %26 = vector.extract_strided_slice %25 {offsets = [0, 0], sizes = [8, 48], strides = [1, 1]} : vector<8x128xf32> to vector<8x48xf32>
    %c96 = arith.constant 96 : index
    %c0_14 = arith.constant 0 : index
    %27 = vector.load %arg3[%c96, %c0_14] : memref<192x128xf32, #tpu.memory_space<vmem>>, vector<48x128xf32>
    %cst_15 = arith.constant dense<0.000000e+00> : vector<8x128xf32>
    %28 = tpu.matmul %26, %27, %cst_15 {dimension_numbers = #tpu.dot_dimension_numbers<[1], [0], [0], [1], [0, 0, 1, 1], [], []>} : vector<8x48xf32>, vector<48x128xf32>, vector<8x128xf32> -> vector<8x128xf32>
    %c144 = arith.constant 144 : index
    %c0_16 = arith.constant 0 : index
    %29 = vector.load %arg3[%c144, %c0_16] : memref<192x128xf32, #tpu.memory_space<vmem>>, vector<4x128xf32>
    %cst_17 = arith.constant dense<0.000000e+00> : vector<8x128xf32>
    %30 = tpu.matmul %4, %29, %cst_17 {dimension_numbers = #tpu.dot_dimension_numbers<[1], [0], [0], [1], [0, 0, 1, 1], [], []>} : vector<8x4xf32>, vector<4x128xf32>, vector<8x128xf32> -> vector<8x128xf32>
    %31 = arith.addf %28, %30 : vector<8x128xf32>
    %32 = vector.extract_strided_slice %0 {offsets = [2, 0], sizes = [1, 128], strides = [1, 1]} : vector<8x128xf32> to vector<1x128xf32>
    %33 = vector.broadcast %32 : vector<1x128xf32> to vector<8x128xf32>
    %34 = arith.addf %31, %33 : vector<8x128xf32>
    %cst_18 = arith.constant 0.000000e+00 : f32
    %35 = vector.broadcast %cst_18 : f32 to vector<8x128xf32>
    %36 = arith.cmpf ogt, %34, %35 : vector<8x128xf32>
    %cst_19 = arith.constant 0.00999999977 : f32
    %37 = vector.broadcast %cst_19 : f32 to vector<8x128xf32>
    %38 = arith.mulf %37, %34 : vector<8x128xf32>
    %39 = arith.select %36, %34, %38 : vector<8x128xi1>, vector<8x128xf32>
    %40 = vector.extract_strided_slice %39 {offsets = [0, 0], sizes = [8, 16], strides = [1, 1]} : vector<8x128xf32> to vector<8x16xf32>
    %c152 = arith.constant 152 : index
    %c0_20 = arith.constant 0 : index
    %41 = vector.load %arg3[%c152, %c0_20] : memref<192x128xf32, #tpu.memory_space<vmem>>, vector<16x128xf32>
    %cst_21 = arith.constant dense<0.000000e+00> : vector<8x128xf32>
    %42 = tpu.matmul %40, %41, %cst_21 {dimension_numbers = #tpu.dot_dimension_numbers<[1], [0], [0], [1], [0, 0, 1, 1], [], []>} : vector<8x16xf32>, vector<16x128xf32>, vector<8x128xf32> -> vector<8x128xf32>
    %43 = vector.extract_strided_slice %0 {offsets = [3, 0], sizes = [1, 128], strides = [1, 1]} : vector<8x128xf32> to vector<1x128xf32>
    %44 = vector.broadcast %43 : vector<1x128xf32> to vector<8x128xf32>
    %45 = arith.addf %42, %44 : vector<8x128xf32>
    %cst_22 = arith.constant 0.000000e+00 : f32
    %46 = vector.broadcast %cst_22 : f32 to vector<8x128xf32>
    %47 = arith.cmpf ogt, %45, %46 : vector<8x128xf32>
    %cst_23 = arith.constant 0.00999999977 : f32
    %48 = vector.broadcast %cst_23 : f32 to vector<8x128xf32>
    %49 = arith.mulf %48, %45 : vector<8x128xf32>
    %50 = arith.select %47, %45, %49 : vector<8x128xi1>, vector<8x128xf32>
    %51 = vector.extract_strided_slice %50 {offsets = [0, 0], sizes = [8, 16], strides = [1, 1]} : vector<8x128xf32> to vector<8x16xf32>
    %c168 = arith.constant 168 : index
    %c0_24 = arith.constant 0 : index
    %52 = vector.load %arg3[%c168, %c0_24] : memref<192x128xf32, #tpu.memory_space<vmem>>, vector<16x128xf32>
    %cst_25 = arith.constant dense<0.000000e+00> : vector<8x128xf32>
    %53 = tpu.matmul %51, %52, %cst_25 {dimension_numbers = #tpu.dot_dimension_numbers<[1], [0], [0], [1], [0, 0, 1, 1], [], []>} : vector<8x16xf32>, vector<16x128xf32>, vector<8x128xf32> -> vector<8x128xf32>
    %54 = vector.extract_strided_slice %0 {offsets = [4, 0], sizes = [1, 128], strides = [1, 1]} : vector<8x128xf32> to vector<1x128xf32>
    %55 = vector.broadcast %54 : vector<1x128xf32> to vector<8x128xf32>
    %56 = arith.addf %53, %55 : vector<8x128xf32>
    %57 = tpu.iota {dimensions = array<i32: 1>} : vector<8x128xi32>
    %cst_26 = arith.constant -2.000000e+00 : f32
    %cst_27 = arith.constant 2.000000e+00 : f32
    %58 = vector.broadcast %cst_26 : f32 to vector<8x128xf32>
    %59 = arith.maximumf %58, %56 : vector<8x128xf32>
    %60 = vector.broadcast %cst_27 : f32 to vector<8x128xf32>
    %61 = arith.minimumf %60, %59 : vector<8x128xf32>
    %cst_28 = arith.constant 0.000000e+00 : f32
    %62 = vector.broadcast %cst_28 : f32 to vector<8x128xf32>
    %63 = arith.maximumf %56, %62 : vector<8x128xf32>
    %64 = math.absf %56 : vector<8x128xf32>
    %cst_29 = arith.constant 0.000000e+00 : f32
    %65 = vector.broadcast %cst_29 : f32 to vector<8x128xf32>
    %66 = arith.subf %65, %64 : vector<8x128xf32>
    %67 = math.exp %66 : vector<8x128xf32>
    %68 = math.log1p %67 : vector<8x128xf32>
    %69 = arith.addf %63, %68 : vector<8x128xf32>
    %cst_30 = arith.constant 1.000000e-10 : f32
    %cst_31 = arith.constant 1.000000e+00 : f32
    %70 = vector.broadcast %cst_30 : f32 to vector<8x128xf32>
    %71 = arith.maximumf %70, %69 : vector<8x128xf32>
    %72 = vector.broadcast %cst_31 : f32 to vector<8x128xf32>
    %73 = arith.minimumf %72, %71 : vector<8x128xf32>
    %c64_i32 = arith.constant 64 : i32
    %74 = vector.broadcast %c64_i32 : i32 to vector<8x128xi32>
    %75 = arith.cmpi slt, %57, %74 : vector<8x128xi32>
    %76 = arith.select %75, %61, %73 : vector<8x128xi1>, vector<8x128xf32>
    %c0_32 = arith.constant 0 : index
    %c0_33 = arith.constant 0 : index
    %c0_34 = arith.constant 0 : index
    %77 = vector.load %arg4[%c0_32, %c0_33, %c0_34] : memref<1x8x128xf32, #tpu.memory_space<vmem>>, vector<1x8x128xf32>
    %78 = vector.shape_cast %77 : vector<1x8x128xf32> to vector<8x128xf32>
    %79 = vector.shape_cast %76 : vector<8x128xf32> to vector<1x8x128xf32>
    tpu.vector_store %arg4[%c0_32, %c0_33, %c0_34], %79 {strides = array<i32>} : memref<1x8x128xf32, #tpu.memory_space<vmem>>, vector<1x8x128xf32>,
    return
  }
  func.func @transform_0(%arg0: i32) -> (i32, i32, i32) {
    %c0_i32 = arith.constant 0 : i32
    %c0_i32_0 = arith.constant 0 : i32
    %c0_i32_1 = arith.constant 0 : i32
    return %arg0, %c0_i32, %c0_i32_0 : i32, i32, i32
  }
  func.func @transform_1(%arg0: i32) -> (i32, i32, i32) {
    %c0_i32 = arith.constant 0 : i32
    %c0_i32_0 = arith.constant 0 : i32
    %c0_i32_1 = arith.constant 0 : i32
    return %arg0, %c0_i32, %c0_i32_0 : i32, i32, i32
  }
  func.func @transform_2(%arg0: i32) -> (i32, i32) {
    %c0_i32 = arith.constant 0 : i32
    %c0_i32_0 = arith.constant 0 : i32
    %c0_i32_1 = arith.constant 0 : i32
    return %c0_i32, %c0_i32_0 : i32, i32
  }
  func.func @transform_3(%arg0: i32) -> (i32, i32, i32) {
    %c0_i32 = arith.constant 0 : i32
    %c0_i32_0 = arith.constant 0 : i32
    %c0_i32_1 = arith.constant 0 : i32
    return %arg0, %c0_i32, %c0_i32_0 : i32, i32, i32
  }
}

</mosaic_0001>

<llo_original>
// kernel: forward_steps.1
$region0: #{forward_steps.1}
  #allocation0 [shape = 'u32[]', space=smem, size = 0x4, offset = 0x4, fixed_abs, tag = 'smem constant byte address 0x4 - core index']
  #allocation1 [shape = 'u32[144,128]{1,0:T(1,128)}', space=vmem, size = 0x12000, scoped, tag = 'internal scratch']
  %s0 = inlined_call_operand.vmem [shape: f32[4,8,48], index: 0, kind: input, shape index: {}]
  %s1 = inlined_call_operand.vmem [shape: f32[4,8,4], index: 1, kind: input, shape index: {}]
  %s2 = inlined_call_operand.vmem [shape: f32[192,128], index: 2, kind: input, shape index: {}]
  %s3 = inlined_call_operand.vmem [shape: f32[4,8,128], index: 3, kind: output, shape index: {}]
  %s4 = sld [smem:[#allocation0]]
  $region45: #{forward_steps.1} parent=0
    _
  %s6 = ssub.s32 1, %s4
  %s7 = scalar_select 0, %s6, %s4
  loop: start=0, step=1, limit=6
  $region2: #{forward_steps.1} parent=0 // loop_pre_header
    _
  $region3: #{forward_steps.1} parent=0 // loop_header
    %s9 = sphi 0, %s13
    %p10 = scmp.ge.s32.totalorder %s9, 6
    %s19 = sphi 0, %s21
    %s22 = sphi 0, %s19
    %s23 = sphi 0, %s22
    %s39 = sphi 0, %s23
    %s45 = sphi 0, %s47
    %s48 = sphi 0, %s45
    %s49 = sphi 0, %s48
    %s65 = sphi 0, %s49
    %s69 = sphi 0, %s69
    %s71 = sphi 0, %s69
    %s72 = sphi 0, %s71
    %s86 = sphi 0, %s72
    %s92 = sphi 0, %s94
    %s95 = sphi 0, %s92
    %s96 = sphi 0, %s95
    %s112 = sphi 0, %s96
  $region4: #{forward_steps.1} parent=0 // loop_header_branch
    %12 = sbr.rel (%p10) target = $region8
  $region5: #{forward_steps.1} parent=0 // loop_body
    %s14 = ssub.s32 %s9, 1
    %s15 = ssub.s32 %s9, 2
    %s16 = sadd.s32 %s9, 1
    %s17 = ssub.s32 %s9, %s16
    %p18 = scmp.eq.s32.totalorder %s17, 0
    %s20 = sadd.s32 %s19, 1
    %s21 = scalar_select %p18, %s19, %s20
    %p24 = pneg %p18
    %p25 = scmp.eq.s32.totalorder %s9, 3
    %p26 = por %p24, %p25
    %p27 = scmp.ne.s32.totalorder %s19, %s22
    %p28 = scmp.eq.s32.totalorder %s9, 0
    %p29 = por %p27, %p28
    %p30 = scmp.ne.s32.totalorder %s19, %s22
    %p31 = scmp.eq.s32.totalorder %s14, 3
    %p32 = por %p30, %p31
    %p33 = scmp.ne.s32.totalorder %s22, %s23
    %p34 = scmp.eq.s32.totalorder %s14, 0
    %p35 = por %p33, %p34
    %p36 = scmp.ne.s32.totalorder %s22, %s23
    %p37 = scmp.eq.s32.totalorder %s15, 3
    %p38 = por %p36, %p37
    %p40 = scmp.ne.s32.totalorder %s23, %s39
    %p41 = scmp.eq.s32.totalorder %s15, 0
    %p42 = por %p40, %p41
    %s43 = ssub.s32 %s9, %s16
    %p44 = scmp.eq.s32.totalorder %s43, 0
    %s46 = sadd.s32 %s45, 1
    %s47 = scalar_select %p44, %s45, %s46
    %p50 = pneg %p44
    %p51 = scmp.eq.s32.totalorder %s9, 3
    %p52 = por %p50, %p51
    %p53 = scmp.ne.s32.totalorder %s45, %s48
    %p54 = scmp.eq.s32.totalorder %s9, 0
    %p55 = por %p53, %p54
    %p56 = scmp.ne.s32.totalorder %s45, %s48
    %p57 = scmp.eq.s32.totalorder %s14, 3
    %p58 = por %p56, %p57
    %p59 = scmp.ne.s32.totalorder %s48, %s49
    %p60 = scmp.eq.s32.totalorder %s14, 0
    %p61 = por %p59, %p60
    %p62 = scmp.ne.s32.totalorder %s48, %s49
    %p63 = scmp.eq.s32.totalorder %s15, 3
    %p64 = por %p62, %p63
    %p66 = scmp.ne.s32.totalorder %s49, %s65
    %p67 = scmp.eq.s32.totalorder %s15, 0
    %p68 = por %p66, %p67
    %s70 = sadd.s32 %s69, 1
    %p73 = scmp.eq.s32.totalorder %s9, 3
    %p74 = scmp.ne.s32.totalorder %s69, %s71
    %p75 = scmp.eq.s32.totalorder %s9, 0
    %p76 = por %p74, %p75
    %p77 = scmp.ne.s32.totalorder %s69, %s71
    %p78 = scmp.eq.s32.totalorder %s14, 3
    %p79 = por %p77, %p78
    %p80 = scmp.ne.s32.totalorder %s71, %s72
    %p81 = scmp.eq.s32.totalorder %s14, 0
    %p82 = por %p80, %p81
    %p83 = scmp.ne.s32.totalorder %s71, %s72
    %p84 = scmp.eq.s32.totalorder %s15, 3
    %p85 = por %p83, %p84
    %p87 = scmp.ne.s32.totalorder %s72, %s86
    %p88 = scmp.eq.s32.totalorder %s15, 0
    %p89 = por %p87, %p88
    %s90 = ssub.s32 %s9, %s16
    %p91 = scmp.eq.s32.totalorder %s90, 0
    %s93 = sadd.s32 %s92, 1
    %s94 = scalar_select %p91, %s92, %s93
    %p97 = pneg %p91
    %p98 = scmp.eq.s32.totalorder %s9, 3
    %p99 = por %p97, %p98
    %p100 = scmp.ne.s32.totalorder %s92, %s95
    %p101 = scmp.eq.s32.totalorder %s9, 0
    %p102 = por %p100, %p101
    %p103 = scmp.ne.s32.totalorder %s92, %s95
    %p104 = scmp.eq.s32.totalorder %s14, 3
    %p105 = por %p103, %p104
    %p106 = scmp.ne.s32.totalorder %s95, %s96
    %p107 = scmp.eq.s32.totalorder %s14, 0
    %p108 = por %p106, %p107
    %p109 = scmp.ne.s32.totalorder %s95, %s96
    %p110 = scmp.eq.s32.totalorder %s15, 3
    %p111 = por %p109, %p110
    %p113 = scmp.ne.s32.totalorder %s96, %s112
    %p114 = scmp.eq.s32.totalorder %s15, 0
    %p115 = por %p113, %p114
    %p116 = scmp.le.s32.totalorder 1, %s9
    %p117 = scmp.lt.s32.totalorder %s9, 5
    %p118 = pnand %p116, %p117
    %p119 = pneg %p118
    // Predicated region
    $region9: #{forward_steps.1} parent=5 // pred_check
      _
    $region10: #{forward_steps.1} parent=5 // pred_check_branch
      %121 = sbr.rel (%p118) target = $region12
    $region11: #{forward_steps.1} parent=5 // pred_region
      %s122 = ssub.s32 %s9, 1
      // Predicated region
      $region13: #{forward_steps.1} parent=11 // pred_check
        %p123 = pneg %p82
      $region14: #{forward_steps.1} parent=11 // pred_check_branch
        %125 = sbr.rel (%p123) target = $region16
      $region15: #{forward_steps.1} parent=11 // pred_region
        _
      $region16: #{forward_steps.1} parent=11 // pred_fallthru
        _
    $region12: #{forward_steps.1} parent=5 // pred_fallthru
      _
    %p126 = scmp.lt.s32.totalorder %s9, 4
    // Predicated region
    $region17: #{forward_steps.1} parent=5 // pred_check
      %p127 = pneg %p126
    $region18: #{forward_steps.1} parent=5 // pred_check_branch
      %129 = sbr.rel (%p127) target = $region20
    $region19: #{forward_steps.1} parent=5 // pred_region
      // Predicated region
      $region21: #{forward_steps.1} parent=19 // pred_check
        %p130 = pneg %p29
      $region22: #{forward_steps.1} parent=19 // pred_check_branch
        %132 = sbr.rel (%p130) target = $region24
      $region23: #{forward_steps.1} parent=19 // pred_region
        %p133 = scmp.lt.s32.totalorder %s9, 3
        %s134 = scalar_select %p133, %s9, 3
        %s135 = smul.addr %s134, 8
        %s136 = scalar_lea.vmem %s0, %s135
      $region24: #{forward_steps.1} parent=19 // pred_fallthru
        _
      // Predicated region
      $region25: #{forward_steps.1} parent=19 // pred_check
        %p137 = pneg %p55
      $region26: #{forward_steps.1} parent=19 // pred_check_branch
        %139 = sbr.rel (%p137) target = $region28
      $region27: #{forward_steps.1} parent=19 // pred_region
        %p140 = scmp.lt.s32.totalorder %s9, 3
        %s141 = scalar_select %p140, %s9, 3
        %s142 = smul.addr %s141, 8
        %s143 = scalar_lea.vmem %s1, %s142
      $region28: #{forward_steps.1} parent=19 // pred_fallthru
        _
    $region20: #{forward_steps.1} parent=5 // pred_fallthru
      _
    %p144 = scmp.le.s32.totalorder 1, %s9
    %p145 = scmp.lt.s32.totalorder %s9, 5
    %p146 = pnand %p144, %p145
    %p147 = pneg %p146
    // Predicated region
    $region29: #{forward_steps.1} parent=5 // pred_check
      _
    $region30: #{forward_steps.1} parent=5 // pred_check_branch
      %149 = sbr.rel (%p146) target = $region32
    $region31: #{forward_steps.1} parent=5 // pred_region
      %s150 = ssub.s32 %s9, 1
      %p151 = scmp.lt.s32.totalorder %s14, 3
      %s152 = scalar_select %p151, %s14, 3
      %s153 = smul.addr %s152, 8
      %s154 = scalar_lea.vmem %s0, %s153
      %p155 = pneg %p35
      %p156 = pneg %p32
      %p157 = scmp.lt.s32.totalorder %s14, 3
      %s158 = scalar_select %p157, %s14, 3
      %s159 = smul.addr %s158, 8
      %s160 = scalar_lea.vmem %s1, %s159
      %p161 = pneg %p61
      %p162 = pneg %p58
      %p163 = pneg %p82
      %p164 = pneg %p79
      %p165 = pneg %p108
      %p166 = pneg %p105
      %p167 = scmp.lt.s32.totalorder %s14, 3
      %s168 = scalar_select %p167, %s14, 3
      %s169 = smul.addr %s168, 8
      %s170 = scalar_lea.vmem %s3, %s169
      %p171 = scmp.lt.s32.totalorder %s14, 3
      %s172 = scalar_select %p171, %s14, 3
      %s173 = smul.addr %s172, 8
      %s174 = scalar_lea.vmem %s0, %s173
      %p175 = scmp.lt.s32.totalorder %s14, 3
      %s176 = scalar_select %p175, %s14, 3
      %s177 = smul.addr %s176, 8
      %s178 = scalar_lea.vmem %s1, %s177
      %p179 = scmp.lt.s32.totalorder %s14, 3
      %s180 = scalar_select %p179, %s14, 3
      %s181 = smul.addr %s180, 8
      %s182 = scalar_lea.vmem %s3, %s181
      %v183 = vld [vmem:[%s2 + $0xb8] sm:$0xff]
      %v184 = vld [vmem:[%s174] sm:$0xff]
      %v185 = vld [vmem:[%s178] sm:$0xff]
      %v186 = vld [vmem:[%s2] sm:$0xff]
      %v187 = vld [vmem:[%s2 + $0x8] sm:$0xff]
      %v188 = vld [vmem:[%s2 + $0x10] sm:$0xff]
      %v189 = vld [vmem:[%s2 + $0x18] sm:$0xff]
      %v190 = vld [vmem:[%s2 + $0x20] sm:$0xff]
      %v191 = vld [vmem:[%s2 + $0x28] sm:$0xff]
      %v192 = vlaneseq
      %v193 = vshrl.u32 %v192, 7
      %v194 = vsub.s32 0, %v193
      %v195 = vrot.slane %v183, %v194
      %vm196 = vcmask 392192
      %v198 = vsel %vm196, %v184, 0
      %200 = vmatprep.subr.mxu0 0.0
      %201 = vmatpush1.msra.mxu0 0.0
      %202 = vmatprep.subr.mxu0 0.0
      %203 = vmatpush1.msra.mxu0 0.0
      %204 = vmatprep.subr.mxu0 0.0
      %205 = vmatpush1.msra.mxu0 0.0
      %206 = vmatprep.subr.mxu0 0.0
      %207 = vmatpush1.msra.mxu0 0.0
      %208 = vmatprep.subr.mxu0 0.0
      %209 = vmatpush1.msra.mxu0 0.0
      %210 = vmatprep.subr.mxu0 0.0
      %211 = vmatpush1.msra.mxu0 0.0
      %212 = vmatprep.subr.mxu0 0.0
      %213 = vmatpush1.msra.mxu0 0.0
      %214 = vmatprep.subr.mxu0 0.0
      %215 = vmatpush1.msra.mxu0 0.0
      %216 = vmatprep.subr.mxu0 0.0
      %217 = vmatpush1.msra.mxu0 0.0
      %218 = vmatprep.subr.mxu0 0.0
      %219 = vmatpush1.msra.mxu0 0.0
      %220 = vmatprep.subr.mxu0 0.0
      %221 = vmatpush1.msra.mxu0 %v191
      %222 = vmatprep.subr.mxu0 0.0
      %223 = vmatpush1.msra.mxu0 %v190
      %224 = vmatprep.subr.mxu0 0.0
      %225 = vmatpush1.msra.mxu0 %v189
      %226 = vmatprep.subr.mxu0 0.0
      %227 = vmatpush1.msra.mxu0 %v188
      %228 = vmatprep.subr.mxu0 0.0
      %229 = vmatpush1.msra.mxu0 %v187
      %230 = vmatprep.subr.mxu0 0.0
      %231 = vmatpush1.msra.mxu0 %v186
      %232 = vmatprep.subr.mxu0 0.0
      %233 = vmatpush2.msra.mxu0 0.0
      %234 = vmatprep.subr.mxu0 0.0
      %235 = vmatpush2.msra.mxu0 0.0
      %236 = vmatprep.subr.mxu0 0.0
      %237 = vmatpush2.msra.mxu0 0.0
      %238 = vmatprep.subr.mxu0 0.0
      %239 = vmatpush2.msra.mxu0 0.0
      %240 = vmatprep.subr.mxu0 0.0
      %241 = vmatpush2.msra.mxu0 0.0
      %242 = vmatprep.subr.mxu0 0.0
      %243 = vmatpush2.msra.mxu0 0.0
      %244 = vmatprep.subr.mxu0 0.0
      %245 = vmatpush2.msra.mxu0 0.0
      %246 = vmatprep.subr.mxu0 0.0
      %247 = vmatpush2.msra.mxu0 0.0
      %248 = vmatprep.subr.mxu0 0.0
      %249 = vmatpush2.msra.mxu0 0.0
      %250 = vmatprep.subr.mxu0 0.0
      %251 = vmatpush2.msra.mxu0 0.0
      %252 = vmatprep.subr.mxu0 0.0
      %253 = vmatpush2.msra.mxu0 0.0
      %254 = vmatprep.subr.mxu0 0.0
      %255 = vmatpush2.msra.mxu0 0.0
      %256 = vmatprep.subr.mxu0 0.0
      %257 = vmatpush2.msra.mxu0 0.0
      %258 = vmatprep.subr.mxu0 0.0
      %259 = vmatpush2.msra.mxu0 0.0
      %260 = vmatprep.subr.mxu0 0.0
      %261 = vmatpush2.msra.mxu0 0.0
      %262 = vmatprep.subr.mxu0 0.0
      %263 = vmatpush2.msra.mxu0 0.0
      %264 = vmatprep.mubr.f32.mxu0 0.0
      %265 = vmatmul.mubr.f32.gmra.mxu0 %v198
      %v266 = vpop.f32.mrf.mxu0
      %v267 = vadd.f32 %v195, %v266
      %v268 = vpop.f32.mrf.mxu0
      %269 = vdwg.mxu0
      %vm270 = vcmp.gt.f32.partialorder %v267, 0.0
      %v271 = vmul.f32 %v267, 0.01
      %v272 = vsel %vm270, %v267, %v271
      %v273 = vld [vmem:[%s2 + $0x30] sm:$0xff]
      %v274 = vld [vmem:[%s2 + $0x38] sm:$0xff]
      %v275 = vld [vmem:[%s2 + $0x40] sm:$0xff]
      %v276 = vld [vmem:[%s2 + $0x48] sm:$0xff]
      %v277 = vld [vmem:[%s2 + $0x50] sm:$0xff]
      %v278 = vld [vmem:[%s2 + $0x58] sm:$0xff]
      %v279 = vlaneseq
      %v280 = vshrl.u32 %v279, 7
      %v281 = vsub.s32 1, %v280
      %v282 = vrot.slane %v183, %v281
      %v284 = vsel %vm196, %v272, 0
      %286 = vmatprep.subr.mxu0 0.0
      %287 = vmatpush1.msra.mxu0 0.0
      %288 = vmatprep.subr.mxu0 0.0
      %289 = vmatpush1.msra.mxu0 0.0
      %290 = vmatprep.subr.mxu0 0.0
      %291 = vmatpush1.msra.mxu0 0.0
      %292 = vmatprep.subr.mxu0 0.0
      %293 = vmatpush1.msra.mxu0 0.0
      %294 = vmatprep.subr.mxu0 0.0
      %295 = vmatpush1.msra.mxu0 0.0
      %296 = vmatprep.subr.mxu0 0.0
      %297 = vmatpush1.msra.mxu0 0.0
      %298 = vmatprep.subr.mxu0 0.0
      %299 = vmatpush1.msra.mxu0 0.0
      %300 = vmatprep.subr.mxu0 0.0
      %301 = vmatpush1.msra.mxu0 0.0
      %302 = vmatprep.subr.mxu0 0.0
      %303 = vmatpush1.msra.mxu0 0.0
      %304 = vmatprep.subr.mxu0 0.0
      %305 = vmatpush1.msra.mxu0 0.0
      %306 = vmatprep.subr.mxu0 0.0
      %307 = vmatpush1.msra.mxu0 %v278
      %308 = vmatprep.subr.mxu0 0.0
      %309 = vmatpush1.msra.mxu0 %v277
      %310 = vmatprep.subr.mxu0 0.0
      %311 = vmatpush1.msra.mxu0 %v276
      %312 = vmatprep.subr.mxu0 0.0
      %313 = vmatpush1.msra.mxu0 %v275
      %314 = vmatprep.subr.mxu0 0.0
      %315 = vmatpush1.msra.mxu0 %v274
      %316 = vmatprep.subr.mxu0 0.0
      %317 = vmatpush1.msra.mxu0 %v273
      %318 = vmatprep.subr.mxu0 0.0
      %319 = vmatpush2.msra.mxu0 0.0
      %320 = vmatprep.subr.mxu0 0.0
      %321 = vmatpush2.msra.mxu0 0.0
      %322 = vmatprep.subr.mxu0 0.0
      %323 = vmatpush2.msra.mxu0 0.0
      %324 = vmatprep.subr.mxu0 0.0
      %325 = vmatpush2.msra.mxu0 0.0
      %326 = vmatprep.subr.mxu0 0.0
      %327 = vmatpush2.msra.mxu0 0.0
      %328 = vmatprep.subr.mxu0 0.0
      %329 = vmatpush2.msra.mxu0 0.0
      %330 = vmatprep.subr.mxu0 0.0
      %331 = vmatpush2.msra.mxu0 0.0
      %332 = vmatprep.subr.mxu0 0.0
      %333 = vmatpush2.msra.mxu0 0.0
      %334 = vmatprep.subr.mxu0 0.0
      %335 = vmatpush2.msra.mxu0 0.0
      %336 = vmatprep.subr.mxu0 0.0
      %337 = vmatpush2.msra.mxu0 0.0
      %338 = vmatprep.subr.mxu0 0.0
      %339 = vmatpush2.msra.mxu0 0.0
      %340 = vmatprep.subr.mxu0 0.0
      %341 = vmatpush2.msra.mxu0 0.0
      %342 = vmatprep.subr.mxu0 0.0
      %343 = vmatpush2.msra.mxu0 0.0
      %344 = vmatprep.subr.mxu0 0.0
      %345 = vmatpush2.msra.mxu0 0.0
      %346 = vmatprep.subr.mxu0 0.0
      %347 = vmatpush2.msra.mxu0 0.0
      %348 = vmatprep.subr.mxu0 0.0
      %349 = vmatpush2.msra.mxu0 0.0
      %350 = vmatprep.mubr.f32.mxu0 0.0
      %351 = vmatmul.mubr.f32.gmra.mxu0 %v284
      %v352 = vpop.f32.mrf.mxu0
      %v353 = vadd.f32 %v282, %v352
      %v354 = vpop.f32.mrf.mxu0
      %355 = vdwg.mxu0
      %vm356 = vcmp.gt.f32.partialorder %v353, 0.0
      %v357 = vmul.f32 %v353, 0.01
      %v358 = vsel %vm356, %v353, %v357
      %v359 = vld [vmem:[%s2 + $0x60] sm:$0xff]
      %v360 = vld [vmem:[%s2 + $0x68] sm:$0xff]
      %v361 = vld [vmem:[%s2 + $0x70] sm:$0xff]
      %v362 = vld [vmem:[%s2 + $0x78] sm:$0xff]
      %v363 = vld [vmem:[%s2 + $0x80] sm:$0xff]
      %v364 = vld [vmem:[%s2 + $0x88] sm:$0xff]
      %v365 = vld [vmem:[%s2 + $0x90] sm:$0xf]
      %vm366 = vcmask 31744
      %v368 = vsel %vm366, %v185, 0
      %vm370 = vcmask 1043456
      %v372 = vsel %vm370, %v365, 0
      %374 = vmatprep.subr.mxu0 0.0
      %375 = vmatpush1.msra.mxu0 0.0
      %376 = vmatprep.subr.mxu0 0.0
      %377 = vmatpush1.msra.mxu0 0.0
      %378 = vmatprep.subr.mxu0 0.0
      %379 = vmatpush1.msra.mxu0 0.0
      %380 = vmatprep.subr.mxu0 0.0
      %381 = vmatpush1.msra.mxu0 0.0
      %382 = vmatprep.subr.mxu0 0.0
      %383 = vmatpush1.msra.mxu0 0.0
      %384 = vmatprep.subr.mxu0 0.0
      %385 = vmatpush1.msra.mxu0 0.0
      %386 = vmatprep.subr.mxu0 0.0
      %387 = vmatpush1.msra.mxu0 0.0
      %388 = vmatprep.subr.mxu0 0.0
      %389 = vmatpush1.msra.mxu0 0.0
      %390 = vmatprep.subr.mxu0 0.0
      %391 = vmatpush1.msra.mxu0 0.0
      %392 = vmatprep.subr.mxu0 0.0
      %393 = vmatpush1.msra.mxu0 0.0
      %394 = vmatprep.subr.mxu0 0.0
      %395 = vmatpush1.msra.mxu0 0.0
      %396 = vmatprep.subr.mxu0 0.0
      %397 = vmatpush1.msra.mxu0 0.0
      %398 = vmatprep.subr.mxu0 0.0
      %399 = vmatpush1.msra.mxu0 0.0
      %400 = vmatprep.subr.mxu0 0.0
      %401 = vmatpush1.msra.mxu0 0.0
      %402 = vmatprep.subr.mxu0 0.0
      %403 = vmatpush1.msra.mxu0 0.0
      %404 = vmatprep.subr.mxu0 0.0
      %405 = vmatpush1.msra.mxu0 %v372
      %406 = vmatprep.subr.mxu0 0.0
      %407 = vmatpush2.msra.mxu0 0.0
      %408 = vmatprep.subr.mxu0 0.0
      %409 = vmatpush2.msra.mxu0 0.0
      %410 = vmatprep.subr.mxu0 0.0
      %411 = vmatpush2.msra.mxu0 0.0
      %412 = vmatprep.subr.mxu0 0.0
      %413 = vmatpush2.msra.mxu0 0.0
      %414 = vmatprep.subr.mxu0 0.0
      %415 = vmatpush2.msra.mxu0 0.0
      %416 = vmatprep.subr.mxu0 0.0
      %417 = vmatpush2.msra.mxu0 0.0
      %418 = vmatprep.subr.mxu0 0.0
      %419 = vmatpush2.msra.mxu0 0.0
      %420 = vmatprep.subr.mxu0 0.0
      %421 = vmatpush2.msra.mxu0 0.0
      %422 = vmatprep.subr.mxu0 0.0
      %423 = vmatpush2.msra.mxu0 0.0
      %424 = vmatprep.subr.mxu0 0.0
      %425 = vmatpush2.msra.mxu0 0.0
      %426 = vmatprep.subr.mxu0 0.0
      %427 = vmatpush2.msra.mxu0 0.0
      %428 = vmatprep.subr.mxu0 0.0
      %429 = vmatpush2.msra.mxu0 0.0
      %430 = vmatprep.subr.mxu0 0.0
      %431 = vmatpush2.msra.mxu0 0.0
      %432 = vmatprep.subr.mxu0 0.0
      %433 = vmatpush2.msra.mxu0 0.0
      %434 = vmatprep.subr.mxu0 0.0
      %435 = vmatpush2.msra.mxu0 0.0
      %436 = vmatprep.subr.mxu0 0.0
      %437 = vmatpush2.msra.mxu0 0.0
      %438 = vmatprep.mubr.f32.mxu0 0.0
      %439 = vmatmul.mubr.f32.gmra.mxu0 %v368
      %v440 = vpop.f32.mrf.mxu0
      %v441 = vadd.f32 0.0, %v440
      %v442 = vpop.f32.mrf.mxu0
      %443 = vdwg.mxu0
      %v445 = vsel %vm196, %v358, 0
      %447 = vmatprep.subr.mxu0 0.0
      %448 = vmatpush1.msra.mxu0 0.0
      %449 = vmatprep.subr.mxu0 0.0
      %450 = vmatpush1.msra.mxu0 0.0
      %451 = vmatprep.subr.mxu0 0.0
      %452 = vmatpush1.msra.mxu0 0.0
      %453 = vmatprep.subr.mxu0 0.0
      %454 = vmatpush1.msra.mxu0 0.0
      %455 = vmatprep.subr.mxu0 0.0
      %456 = vmatpush1.msra.mxu0 0.0
      %457 = vmatprep.subr.mxu0 0.0
      %458 = vmatpush1.msra.mxu0 0.0
      %459 = vmatprep.subr.mxu0 0.0
      %460 = vmatpush1.msra.mxu0 0.0
      %461 = vmatprep.subr.mxu0 0.0
      %462 = vmatpush1.msra.mxu0 0.0
      %463 = vmatprep.subr.mxu0 0.0
      %464 = vmatpush1.msra.mxu0 0.0
      %465 = vmatprep.subr.mxu0 0.0
      %466 = vmatpush1.msra.mxu0 0.0
      %467 = vmatprep.subr.mxu0 0.0
      %468 = vmatpush1.msra.mxu0 %v364
      %469 = vmatprep.subr.mxu0 0.0
      %470 = vmatpush1.msra.mxu0 %v363
      %471 = vmatprep.subr.mxu0 0.0
      %472 = vmatpush1.msra.mxu0 %v362
      %473 = vmatprep.subr.mxu0 0.0
      %474 = vmatpush1.msra.mxu0 %v361
      %475 = vmatprep.subr.mxu0 0.0
      %476 = vmatpush1.msra.mxu0 %v360
      %477 = vmatprep.subr.mxu0 0.0
      %478 = vmatpush1.msra.mxu0 %v359
      %479 = vmatprep.subr.mxu0 0.0
      %480 = vmatpush2.msra.mxu0 0.0
      %481 = vmatprep.subr.mxu0 0.0
      %482 = vmatpush2.msra.mxu0 0.0
      %483 = vmatprep.subr.mxu0 0.0
      %484 = vmatpush2.msra.mxu0 0.0
      %485 = vmatprep.subr.mxu0 0.0
      %486 = vmatpush2.msra.mxu0 0.0
      %487 = vmatprep.subr.mxu0 0.0
      %488 = vmatpush2.msra.mxu0 0.0
      %489 = vmatprep.subr.mxu0 0.0
      %490 = vmatpush2.msra.mxu0 0.0
      %491 = vmatprep.subr.mxu0 0.0
      %492 = vmatpush2.msra.mxu0 0.0
      %493 = vmatprep.subr.mxu0 0.0
      %494 = vmatpush2.msra.mxu0 0.0
      %495 = vmatprep.subr.mxu0 0.0
      %496 = vmatpush2.msra.mxu0 0.0
      %497 = vmatprep.subr.mxu0 0.0
      %498 = vmatpush2.msra.mxu0 0.0
      %499 = vmatprep.subr.mxu0 0.0
      %500 = vmatpush2.msra.mxu0 0.0
      %501 = vmatprep.subr.mxu0 0.0
      %502 = vmatpush2.msra.mxu0 0.0
      %503 = vmatprep.subr.mxu0 0.0
      %504 = vmatpush2.msra.mxu0 0.0
      %505 = vmatprep.subr.mxu0 0.0
      %506 = vmatpush2.msra.mxu0 0.0
      %507 = vmatprep.subr.mxu0 0.0
      %508 = vmatpush2.msra.mxu0 0.0
      %509 = vmatprep.subr.mxu0 0.0
      %510 = vmatpush2.msra.mxu0 0.0
      %511 = vmatprep.mubr.f32.mxu0 0.0
      %512 = vmatmul.mubr.f32.gmra.mxu0 %v445
      %v513 = vpop.f32.mrf.mxu0
      %v514 = vadd.f32 %v441, %v513
      %v515 = vpop.f32.mrf.mxu0
      %516 = vdwg.mxu0
      %v517 = vlaneseq
      %v518 = vshrl.u32 %v517, 7
      %v519 = vsub.s32 2, %v518
      %v520 = vrot.slane %v183, %v519
      %v521 = vadd.f32 %v514, %v520
      %vm522 = vcmp.gt.f32.partialorder %v521, 0.0
      %v523 = vmul.f32 %v521, 0.01
      %v524 = vsel %vm522, %v521, %v523
      %v525 = vld [vmem:[%s2 + $0x98] sm:$0xff]
      %v526 = vld [vmem:[%s2 + $0xa0] sm:$0xff]
      %v527 = vlaneseq
      %v528 = vshrl.u32 %v527, 7
      %v529 = vsub.s32 3, %v528
      %v530 = vrot.slane %v183, %v529
      %vm531 = vcmask 130048
      %v533 = vsel %vm531, %v524, 0
      %535 = vmatprep.subr.mxu0 0.0
      %536 = vmatpush1.msra.mxu0 0.0
      %537 = vmatprep.subr.mxu0 0.0
      %538 = vmatpush1.msra.mxu0 0.0
      %539 = vmatprep.subr.mxu0 0.0
      %540 = vmatpush1.msra.mxu0 0.0
      %541 = vmatprep.subr.mxu0 0.0
      %542 = vmatpush1.msra.mxu0 0.0
      %543 = vmatprep.subr.mxu0 0.0
      %544 = vmatpush1.msra.mxu0 0.0
      %545 = vmatprep.subr.mxu0 0.0
      %546 = vmatpush1.msra.mxu0 0.0
      %547 = vmatprep.subr.mxu0 0.0
      %548 = vmatpush1.msra.mxu0 0.0
      %549 = vmatprep.subr.mxu0 0.0
      %550 = vmatpush1.msra.mxu0 0.0
      %551 = vmatprep.subr.mxu0 0.0
      %552 = vmatpush1.msra.mxu0 0.0
      %553 = vmatprep.subr.mxu0 0.0
      %554 = vmatpush1.msra.mxu0 0.0
      %555 = vmatprep.subr.mxu0 0.0
      %556 = vmatpush1.msra.mxu0 0.0
      %557 = vmatprep.subr.mxu0 0.0
      %558 = vmatpush1.msra.mxu0 0.0
      %559 = vmatprep.subr.mxu0 0.0
      %560 = vmatpush1.msra.mxu0 0.0
      %561 = vmatprep.subr.mxu0 0.0
      %562 = vmatpush1.msra.mxu0 0.0
      %563 = vmatprep.subr.mxu0 0.0
      %564 = vmatpush1.msra.mxu0 %v526
      %565 = vmatprep.subr.mxu0 0.0
      %566 = vmatpush1.msra.mxu0 %v525
      %567 = vmatprep.subr.mxu0 0.0
      %568 = vmatpush2.msra.mxu0 0.0
      %569 = vmatprep.subr.mxu0 0.0
      %570 = vmatpush2.msra.mxu0 0.0
      %571 = vmatprep.subr.mxu0 0.0
      %572 = vmatpush2.msra.mxu0 0.0
      %573 = vmatprep.subr.mxu0 0.0
      %574 = vmatpush2.msra.mxu0 0.0
      %575 = vmatprep.subr.mxu0 0.0
      %576 = vmatpush2.msra.mxu0 0.0
      %577 = vmatprep.subr.mxu0 0.0
      %578 = vmatpush2.msra.mxu0 0.0
      %579 = vmatprep.subr.mxu0 0.0
      %580 = vmatpush2.msra.mxu0 0.0
      %581 = vmatprep.subr.mxu0 0.0
      %582 = vmatpush2.msra.mxu0 0.0
      %583 = vmatprep.subr.mxu0 0.0
      %584 = vmatpush2.msra.mxu0 0.0
      %585 = vmatprep.subr.mxu0 0.0
      %586 = vmatpush2.msra.mxu0 0.0
      %587 = vmatprep.subr.mxu0 0.0
      %588 = vmatpush2.msra.mxu0 0.0
      %589 = vmatprep.subr.mxu0 0.0
      %590 = vmatpush2.msra.mxu0 0.0
      %591 = vmatprep.subr.mxu0 0.0
      %592 = vmatpush2.msra.mxu0 0.0
      %593 = vmatprep.subr.mxu0 0.0
      %594 = vmatpush2.msra.mxu0 0.0
      %595 = vmatprep.subr.mxu0 0.0
      %596 = vmatpush2.msra.mxu0 0.0
      %597 = vmatprep.subr.mxu0 0.0
      %598 = vmatpush2.msra.mxu0 0.0
      %599 = vmatprep.mubr.f32.mxu0 0.0
      %600 = vmatmul.mubr.f32.gmra.mxu0 %v533
      %v601 = vpop.f32.mrf.mxu0
      %v602 = vadd.f32 %v530, %v601
      %v603 = vpop.f32.mrf.mxu0
      %604 = vdwg.mxu0
      %vm605 = vcmp.gt.f32.partialorder %v602, 0.0
      %v606 = vmul.f32 %v602, 0.01
      %v607 = vsel %vm605, %v602, %v606
      %v608 = vld [vmem:[%s2 + $0xa8] sm:$0xff]
      %v609 = vld [vmem:[%s2 + $0xb0] sm:$0xff]
      %v610 = vlaneseq
      %v611 = vshrl.u32 %v610, 7
      %v612 = vsub.s32 4, %v611
      %v613 = vrot.slane %v183, %v612
      %v615 = vsel %vm531, %v607, 0
      %617 = vmatprep.subr.mxu0 0.0
      %618 = vmatpush1.msra.mxu0 0.0
      %619 = vmatprep.subr.mxu0 0.0
      %620 = vmatpush1.msra.mxu0 0.0
      %621 = vmatprep.subr.mxu0 0.0
      %622 = vmatpush1.msra.mxu0 0.0
      %623 = vmatprep.subr.mxu0 0.0
      %624 = vmatpush1.msra.mxu0 0.0
      %625 = vmatprep.subr.mxu0 0.0
      %626 = vmatpush1.msra.mxu0 0.0
      %627 = vmatprep.subr.mxu0 0.0
      %628 = vmatpush1.msra.mxu0 0.0
      %629 = vmatprep.subr.mxu0 0.0
      %630 = vmatpush1.msra.mxu0 0.0
      %631 = vmatprep.subr.mxu0 0.0
      %632 = vmatpush1.msra.mxu0 0.0
      %633 = vmatprep.subr.mxu0 0.0
      %634 = vmatpush1.msra.mxu0 0.0
      %635 = vmatprep.subr.mxu0 0.0
      %636 = vmatpush1.msra.mxu0 0.0
      %637 = vmatprep.subr.mxu0 0.0
      %638 = vmatpush1.msra.mxu0 0.0
      %639 = vmatprep.subr.mxu0 0.0
      %640 = vmatpush1.msra.mxu0 0.0
      %641 = vmatprep.subr.mxu0 0.0
      %642 = vmatpush1.msra.mxu0 0.0
      %643 = vmatprep.subr.mxu0 0.0
      %644 = vmatpush1.msra.mxu0 0.0
      %645 = vmatprep.subr.mxu0 0.0
      %646 = vmatpush1.msra.mxu0 %v609
      %647 = vmatprep.subr.mxu0 0.0
      %648 = vmatpush1.msra.mxu0 %v608
      %649 = vmatprep.subr.mxu0 0.0
      %650 = vmatpush2.msra.mxu0 0.0
      %651 = vmatprep.subr.mxu0 0.0
      %652 = vmatpush2.msra.mxu0 0.0
      %653 = vmatprep.subr.mxu0 0.0
      %654 = vmatpush2.msra.mxu0 0.0
      %655 = vmatprep.subr.mxu0 0.0
      %656 = vmatpush2.msra.mxu0 0.0
      %657 = vmatprep.subr.mxu0 0.0
      %658 = vmatpush2.msra.mxu0 0.0
      %659 = vmatprep.subr.mxu0 0.0
      %660 = vmatpush2.msra.mxu0 0.0
      %661 = vmatprep.subr.mxu0 0.0
      %662 = vmatpush2.msra.mxu0 0.0
      %663 = vmatprep.subr.mxu0 0.0
      %664 = vmatpush2.msra.mxu0 0.0
      %665 = vmatprep.subr.mxu0 0.0
      %666 = vmatpush2.msra.mxu0 0.0
      %667 = vmatprep.subr.mxu0 0.0
      %668 = vmatpush2.msra.mxu0 0.0
      %669 = vmatprep.subr.mxu0 0.0
      %670 = vmatpush2.msra.mxu0 0.0
      %671 = vmatprep.subr.mxu0 0.0
      %672 = vmatpush2.msra.mxu0 0.0
      %673 = vmatprep.subr.mxu0 0.0
      %674 = vmatpush2.msra.mxu0 0.0
      %675 = vmatprep.subr.mxu0 0.0
      %676 = vmatpush2.msra.mxu0 0.0
      %677 = vmatprep.subr.mxu0 0.0
      %678 = vmatpush2.msra.mxu0 0.0
      %679 = vmatprep.subr.mxu0 0.0
      %680 = vmatpush2.msra.mxu0 0.0
      %681 = vmatprep.mubr.f32.mxu0 0.0
      %682 = vmatmul.mubr.f32.gmra.mxu0 %v615
      %v683 = vpop.f32.mrf.mxu0
      %v684 = vadd.f32 %v613, %v683
      %v685 = vpop.f32.mrf.mxu0
      %686 = vdwg.mxu0
      %v687 = vlaneseq
      %v688 = vand.u32 %v687, 127
      %v689 = vmax.f32 %v684, -2.0
      %v690 = vmin.f32 %v689, 2.0
      %v691 = vmax.f32 %v684, 0.0
      %v692 = vand.u32 2147483647, %v684
      %v693 = vsub.f32 0.0, %v692
      %v694 = vmul.f32 %v693, 1.442695
      %v695 = vpow.pop %v694
      %v696 = vadd.f32 %v695, 1.0
      %v697 = vlog2.pop %v696
      %v698 = vmul.f32 %v697, 0.6931472
      %v699 = vmul.f32 -0.5, %v695
      %v700 = vadd.f32 %v699, 1.0
      %v701 = vmul.f32 %v700, %v695
      %v702 = vand.u32 2147483647, %v695
      %vm703 = vcmp.lt.f32.partialorder %v702, 0.0004427343
      %v704 = vsel %vm703, %v701, %v698
      %v705 = vadd.f32 %v691, %v704
      %v706 = vmax.f32 %v705, 1e-10
      %v707 = vmin.f32 %v706, 1.0
      %vm708 = vcmp.lt.s32.totalorder %v688, 64
      %v709 = vsel %vm708, %v690, %v707
      %710 = vst [vmem:[%s182] sm:$0xff] %v709
      %p711 = scmp.lt.s32.totalorder %s14, 3
      %s712 = scalar_select %p711, %s14, 3
      %s713 = smul.addr %s712, 8
      %s714 = scalar_lea.vmem %s3, %s713
      // Predicated region
      $region33: #{forward_steps.1} parent=31 // pred_check
        %p715 = pneg %p105
      $region34: #{forward_steps.1} parent=31 // pred_check_branch
        %717 = sbr.rel (%p715) target = $region36
      $region35: #{forward_steps.1} parent=31 // pred_region
        _
      $region36: #{forward_steps.1} parent=31 // pred_fallthru
        _
    $region32: #{forward_steps.1} parent=5 // pred_fallthru
      _
    %p718 = scmp.le.s32.totalorder 2, %s9
    // Predicated region
    $region37: #{forward_steps.1} parent=5 // pred_check
      %p719 = pneg %p718
    $region38: #{forward_steps.1} parent=5 // pred_check_branch
      %721 = sbr.rel (%p719) target = $region40
    $region39: #{forward_steps.1} parent=5 // pred_region
      %s722 = ssub.s32 %s9, 2
      // Predicated region
      $region41: #{forward_steps.1} parent=39 // pred_check
        %p723 = pneg %p111
      $region42: #{forward_steps.1} parent=39 // pred_check_branch
        %725 = sbr.rel (%p723) target = $region44
      $region43: #{forward_steps.1} parent=39 // pred_region
        %p726 = scmp.lt.s32.totalorder %s15, 3
        %s727 = scalar_select %p726, %s15, 3
        %s728 = smul.addr %s727, 8
        %s729 = scalar_lea.vmem %s3, %s728
      $region44: #{forward_steps.1} parent=39 // pred_fallthru
        _
    $region40: #{forward_steps.1} parent=5 // pred_fallthru
      _
  $region6: #{forward_steps.1} parent=0 // loop_footer
    %s13 = sadd.s32 1, %s9
  $region7: #{forward_steps.1} parent=0 // loop_footer_branch
    %8 = sbr.rel target = $region3
  $region8: #{forward_steps.1} parent=0 // loop_exit
    _

</llo_original>
